<compile_context>
chip_gen: v7x
topology: tpu7x:2x2x1
jax: 0.10.0
libtpu: 0.0.40
codegen_flags: <defaults>
</compile_context>

<pallas_src>
import functools

import jax
import jax.numpy as jnp
from jax.experimental import pallas as pl
from jax.experimental.pallas import tpu as pltpu


def _lpc2par_kernel(a_ref, k_ref, *, lpc_order, gamma):
    """One lane-dense batch tile of the LPC -> PARCOR recursion (unrolled over M).

    a_ref, k_ref: (M+1, TB) blocks; row m holds coefficient m for TB batch lanes.
    """
    M = lpc_order

    # Gain term K passes through unchanged.
    k_ref[0:1, :] = a_ref[0:1, :]
    if M == 0:
        return

    # Load each LPC coefficient as a lane-dense (1, TB) f32 row; a[j] is the
    # (1-based) coefficient j+1.  Skip the gamma multiply when gamma == 1.
    a = []
    for j in range(M):
        row = a_ref[j + 1 : j + 2, :].astype(jnp.float32)
        if gamma != 1.0:
            row = row * gamma
        a.append(row)

    # Downward Levinson recursion, fully unrolled at trace time.
    # The "flip" is just a Python-level index permutation (a[m-1-j]); the
    # division becomes one reciprocal (EUP) + a multiply per step.
    for m in range(M - 1, 0, -1):
        km = a[m]                                        # (1, TB)
        k_ref[m + 1 : m + 2, :] = km.astype(k_ref.dtype)  # direct row store
        inv_z = pl.reciprocal(1.0 - km * km, approx=False)
        a = [(a[j] - km * a[m - 1 - j]) * inv_z for j in range(m)]

    # m = 0: last reflection coefficient, no further update needed.
    k_ref[1:2, :] = a[0].astype(k_ref.dtype)


def lpc2par(a, lpc_order, gamma=1.0, *, block_cols=2048):
    """Convert LPC to PARCOR coefficients. a: (..., M+1) -> (..., M+1)."""
    assert a.shape[-1] == lpc_order + 1, "dimension of LPC mismatch"
    assert abs(gamma) <= 1

    orig_shape = a.shape
    Mp1 = lpc_order + 1
    B = 1
    for d in orig_shape[:-1]:
        B *= d

    # Present a lane-dense (M+1, B) slab: batch on the lane axis.
    a2 = a.reshape(B, Mp1).T

    # Lane tile: multiple of 128, capped at block_cols (rounded up to 128).
    block_cols = ((block_cols + 127) // 128) * 128
    TB = min(block_cols, ((B + 127) // 128) * 128)
    Bp = ((B + TB - 1) // TB) * TB
    if Bp != B:
        # Zero padding is safe: a=0 -> km=0 -> z=1 (no NaNs in padded lanes).
        a2 = jnp.pad(a2, ((0, 0), (0, Bp - B)))

    kernel = functools.partial(
        _lpc2par_kernel, lpc_order=lpc_order, gamma=float(gamma)
    )
    out = pl.pallas_call(
        kernel,
        out_shape=jax.ShapeDtypeStruct((Mp1, Bp), a.dtype),
        grid=(Bp // TB,),
        in_specs=[pl.BlockSpec((Mp1, TB), lambda i: (0, i))],
        out_specs=pl.BlockSpec((Mp1, TB), lambda i: (0, i)),
        compiler_params=pltpu.CompilerParams(
            dimension_semantics=("parallel",)
        ),
    )(a2)
    return out[:, :B].T.reshape(orig_shape)


def _lpc2par_ref(a, lpc_order, gamma=1.0):
    """Pure-JAX reference mirroring the PyTorch module (warn_type='ignore')."""
    K = a[..., 0:1]
    ar = a[..., 1:] * gamma
    ks = []
    for _ in range(lpc_order - 1, -1, -1):
        km = ar[..., -1:]
        ks.append(km)
        z = 1.0 - km * km
        kk = ar[..., :-1]
        ar = (kk - km * kk[..., ::-1]) / z
    ks.append(K)
    return jnp.concatenate(ks[::-1], axis=-1)


# TODO(synk): warn_type='warn'/'exit' stability checks (host-side warning /
# exception on |km| >= 1) have no clean in-kernel equivalent; 'ignore' semantics
# are implemented.

if __name__ == "__main__":
    lpc_order = 7          # M
    batch_shape = (2, 4)   # arbitrary leading dims

    key = jax.random.PRNGKey(0)
    # Scale down so coefficients are reasonably well-conditioned.
    a = 0.3 * jax.random.normal(
        key, batch_shape + (lpc_order + 1,), dtype=jnp.float32
    )

    ok = True
    for gamma in (1.0, 0.9):
        k = lpc2par(a, lpc_order, gamma)
        k = jax.block_until_ready(k)
        k_ref = _lpc2par_ref(a, lpc_order, gamma)
        ok &= (k.shape == a.shape)
        ok &= bool(jnp.allclose(k, k_ref, atol=1e-5, rtol=1e-5))

    assert ok, "mismatch vs reference"
    print("KERNEL_OK")
</pallas_src>

<mosaic_0001>
module attributes {stable_mosaic.version = 11 : i64} {
  func.func @_lpc2par_kernel(%arg0: i32, %arg1: memref<8x128xf32, #tpu.memory_space<vmem>>, %arg2: memref<8x128xf32, #tpu.memory_space<vmem>>) attributes {dimension_semantics = [#tpu.dimension_semantics<parallel>], iteration_bounds = array<i64: 1>, scalar_prefetch = 0 : i64, scratch_operands = 0 : i64, tpu.core_type = #tpu.core_type<tc>, window_params = [{transform_indices = @transform_0, window_bounds = array<i64: 8, 128>}, {transform_indices = @transform_1, window_bounds = array<i64: 8, 128>}]} {
    %c0 = arith.constant 0 : index
    %c0_0 = arith.constant 0 : index
    %0 = vector.load %arg1[%c0, %c0_0] : memref<8x128xf32, #tpu.memory_space<vmem>>, vector<1x128xf32>
    %c0_1 = arith.constant 0 : index
    %c0_2 = arith.constant 0 : index
    %1 = vector.load %arg2[%c0_1, %c0_2] : memref<8x128xf32, #tpu.memory_space<vmem>>, vector<1x128xf32>
    tpu.vector_store %arg2[%c0_1, %c0_2], %0 {strides = array<i32>} : memref<8x128xf32, #tpu.memory_space<vmem>>, vector<1x128xf32>,
    %c1 = arith.constant 1 : index
    %c0_3 = arith.constant 0 : index
    %2 = vector.load %arg1[%c1, %c0_3] : memref<8x128xf32, #tpu.memory_space<vmem>>, vector<1x128xf32>
    %c2 = arith.constant 2 : index
    %c0_4 = arith.constant 0 : index
    %3 = vector.load %arg1[%c2, %c0_4] : memref<8x128xf32, #tpu.memory_space<vmem>>, vector<1x128xf32>
    %c3 = arith.constant 3 : index
    %c0_5 = arith.constant 0 : index
    %4 = vector.load %arg1[%c3, %c0_5] : memref<8x128xf32, #tpu.memory_space<vmem>>, vector<1x128xf32>
    %c4 = arith.constant 4 : index
    %c0_6 = arith.constant 0 : index
    %5 = vector.load %arg1[%c4, %c0_6] : memref<8x128xf32, #tpu.memory_space<vmem>>, vector<1x128xf32>
    %c5 = arith.constant 5 : index
    %c0_7 = arith.constant 0 : index
    %6 = vector.load %arg1[%c5, %c0_7] : memref<8x128xf32, #tpu.memory_space<vmem>>, vector<1x128xf32>
    %c6 = arith.constant 6 : index
    %c0_8 = arith.constant 0 : index
    %7 = vector.load %arg1[%c6, %c0_8] : memref<8x128xf32, #tpu.memory_space<vmem>>, vector<1x128xf32>
    %c7 = arith.constant 7 : index
    %c0_9 = arith.constant 0 : index
    %8 = vector.load %arg1[%c7, %c0_9] : memref<8x128xf32, #tpu.memory_space<vmem>>, vector<1x128xf32>
    %c7_10 = arith.constant 7 : index
    %c0_11 = arith.constant 0 : index
    %9 = vector.load %arg2[%c7_10, %c0_11] : memref<8x128xf32, #tpu.memory_space<vmem>>, vector<1x128xf32>
    tpu.vector_store %arg2[%c7_10, %c0_11], %8 {strides = array<i32>} : memref<8x128xf32, #tpu.memory_space<vmem>>, vector<1x128xf32>,
    %10 = arith.mulf %8, %8 : vector<1x128xf32>
    %cst = arith.constant 1.000000e+00 : f32
    %11 = vector.broadcast %cst : f32 to vector<1x128xf32>
    %12 = arith.subf %11, %10 : vector<1x128xf32>
    %13 = tpu.reciprocal %12 : vector<1x128xf32> -> vector<1x128xf32>
    %14 = arith.mulf %8, %7 : vector<1x128xf32>
    %15 = arith.subf %2, %14 : vector<1x128xf32>
    %16 = arith.mulf %15, %13 : vector<1x128xf32>
    %17 = arith.mulf %8, %6 : vector<1x128xf32>
    %18 = arith.subf %3, %17 : vector<1x128xf32>
    %19 = arith.mulf %18, %13 : vector<1x128xf32>
    %20 = arith.mulf %8, %5 : vector<1x128xf32>
    %21 = arith.subf %4, %20 : vector<1x128xf32>
    %22 = arith.mulf %21, %13 : vector<1x128xf32>
    %23 = arith.mulf %8, %4 : vector<1x128xf32>
    %24 = arith.subf %5, %23 : vector<1x128xf32>
    %25 = arith.mulf %24, %13 : vector<1x128xf32>
    %26 = arith.mulf %8, %3 : vector<1x128xf32>
    %27 = arith.subf %6, %26 : vector<1x128xf32>
    %28 = arith.mulf %27, %13 : vector<1x128xf32>
    %29 = arith.mulf %8, %2 : vector<1x128xf32>
    %30 = arith.subf %7, %29 : vector<1x128xf32>
    %31 = arith.mulf %30, %13 : vector<1x128xf32>
    %c6_12 = arith.constant 6 : index
    %c0_13 = arith.constant 0 : index
    %32 = vector.load %arg2[%c6_12, %c0_13] : memref<8x128xf32, #tpu.memory_space<vmem>>, vector<1x128xf32>
    tpu.vector_store %arg2[%c6_12, %c0_13], %31 {strides = array<i32>} : memref<8x128xf32, #tpu.memory_space<vmem>>, vector<1x128xf32>,
    %33 = arith.mulf %31, %31 : vector<1x128xf32>
    %cst_14 = arith.constant 1.000000e+00 : f32
    %34 = vector.broadcast %cst_14 : f32 to vector<1x128xf32>
    %35 = arith.subf %34, %33 : vector<1x128xf32>
    %36 = tpu.reciprocal %35 : vector<1x128xf32> -> vector<1x128xf32>
    %37 = arith.mulf %31, %28 : vector<1x128xf32>
    %38 = arith.subf %16, %37 : vector<1x128xf32>
    %39 = arith.mulf %38, %36 : vector<1x128xf32>
    %40 = arith.mulf %31, %25 : vector<1x128xf32>
    %41 = arith.subf %19, %40 : vector<1x128xf32>
    %42 = arith.mulf %41, %36 : vector<1x128xf32>
    %43 = arith.mulf %31, %22 : vector<1x128xf32>
    %44 = arith.subf %22, %43 : vector<1x128xf32>
    %45 = arith.mulf %44, %36 : vector<1x128xf32>
    %46 = arith.mulf %31, %19 : vector<1x128xf32>
    %47 = arith.subf %25, %46 : vector<1x128xf32>
    %48 = arith.mulf %47, %36 : vector<1x128xf32>
    %49 = arith.mulf %31, %16 : vector<1x128xf32>
    %50 = arith.subf %28, %49 : vector<1x128xf32>
    %51 = arith.mulf %50, %36 : vector<1x128xf32>
    %c5_15 = arith.constant 5 : index
    %c0_16 = arith.constant 0 : index
    %52 = vector.load %arg2[%c5_15, %c0_16] : memref<8x128xf32, #tpu.memory_space<vmem>>, vector<1x128xf32>
    tpu.vector_store %arg2[%c5_15, %c0_16], %51 {strides = array<i32>} : memref<8x128xf32, #tpu.memory_space<vmem>>, vector<1x128xf32>,
    %53 = arith.mulf %51, %51 : vector<1x128xf32>
    %cst_17 = arith.constant 1.000000e+00 : f32
    %54 = vector.broadcast %cst_17 : f32 to vector<1x128xf32>
    %55 = arith.subf %54, %53 : vector<1x128xf32>
    %56 = tpu.reciprocal %55 : vector<1x128xf32> -> vector<1x128xf32>
    %57 = arith.mulf %51, %48 : vector<1x128xf32>
    %58 = arith.subf %39, %57 : vector<1x128xf32>
    %59 = arith.mulf %58, %56 : vector<1x128xf32>
    %60 = arith.mulf %51, %45 : vector<1x128xf32>
    %61 = arith.subf %42, %60 : vector<1x128xf32>
    %62 = arith.mulf %61, %56 : vector<1x128xf32>
    %63 = arith.mulf %51, %42 : vector<1x128xf32>
    %64 = arith.subf %45, %63 : vector<1x128xf32>
    %65 = arith.mulf %64, %56 : vector<1x128xf32>
    %66 = arith.mulf %51, %39 : vector<1x128xf32>
    %67 = arith.subf %48, %66 : vector<1x128xf32>
    %68 = arith.mulf %67, %56 : vector<1x128xf32>
    %c4_18 = arith.constant 4 : index
    %c0_19 = arith.constant 0 : index
    %69 = vector.load %arg2[%c4_18, %c0_19] : memref<8x128xf32, #tpu.memory_space<vmem>>, vector<1x128xf32>
    tpu.vector_store %arg2[%c4_18, %c0_19], %68 {strides = array<i32>} : memref<8x128xf32, #tpu.memory_space<vmem>>, vector<1x128xf32>,
    %70 = arith.mulf %68, %68 : vector<1x128xf32>
    %cst_20 = arith.constant 1.000000e+00 : f32
    %71 = vector.broadcast %cst_20 : f32 to vector<1x128xf32>
    %72 = arith.subf %71, %70 : vector<1x128xf32>
    %73 = tpu.reciprocal %72 : vector<1x128xf32> -> vector<1x128xf32>
    %74 = arith.mulf %68, %65 : vector<1x128xf32>
    %75 = arith.subf %59, %74 : vector<1x128xf32>
    %76 = arith.mulf %75, %73 : vector<1x128xf32>
    %77 = arith.mulf %68, %62 : vector<1x128xf32>
    %78 = arith.subf %62, %77 : vector<1x128xf32>
    %79 = arith.mulf %78, %73 : vector<1x128xf32>
    %80 = arith.mulf %68, %59 : vector<1x128xf32>
    %81 = arith.subf %65, %80 : vector<1x128xf32>
    %82 = arith.mulf %81, %73 : vector<1x128xf32>
    %c3_21 = arith.constant 3 : index
    %c0_22 = arith.constant 0 : index
    %83 = vector.load %arg2[%c3_21, %c0_22] : memref<8x128xf32, #tpu.memory_space<vmem>>, vector<1x128xf32>
    tpu.vector_store %arg2[%c3_21, %c0_22], %82 {strides = array<i32>} : memref<8x128xf32, #tpu.memory_space<vmem>>, vector<1x128xf32>,
    %84 = arith.mulf %82, %82 : vector<1x128xf32>
    %cst_23 = arith.constant 1.000000e+00 : f32
    %85 = vector.broadcast %cst_23 : f32 to vector<1x128xf32>
    %86 = arith.subf %85, %84 : vector<1x128xf32>
    %87 = tpu.reciprocal %86 : vector<1x128xf32> -> vector<1x128xf32>
    %88 = arith.mulf %82, %79 : vector<1x128xf32>
    %89 = arith.subf %76, %88 : vector<1x128xf32>
    %90 = arith.mulf %89, %87 : vector<1x128xf32>
    %91 = arith.mulf %82, %76 : vector<1x128xf32>
    %92 = arith.subf %79, %91 : vector<1x128xf32>
    %93 = arith.mulf %92, %87 : vector<1x128xf32>
    %c2_24 = arith.constant 2 : index
    %c0_25 = arith.constant 0 : index
    %94 = vector.load %arg2[%c2_24, %c0_25] : memref<8x128xf32, #tpu.memory_space<vmem>>, vector<1x128xf32>
    tpu.vector_store %arg2[%c2_24, %c0_25], %93 {strides = array<i32>} : memref<8x128xf32, #tpu.memory_space<vmem>>, vector<1x128xf32>,
    %95 = arith.mulf %93, %93 : vector<1x128xf32>
    %cst_26 = arith.constant 1.000000e+00 : f32
    %96 = vector.broadcast %cst_26 : f32 to vector<1x128xf32>
    %97 = arith.subf %96, %95 : vector<1x128xf32>
    %98 = tpu.reciprocal %97 : vector<1x128xf32> -> vector<1x128xf32>
    %99 = arith.mulf %93, %90 : vector<1x128xf32>
    %100 = arith.subf %90, %99 : vector<1x128xf32>
    %101 = arith.mulf %100, %98 : vector<1x128xf32>
    %c1_27 = arith.constant 1 : index
    %c0_28 = arith.constant 0 : index
    %102 = vector.load %arg2[%c1_27, %c0_28] : memref<8x128xf32, #tpu.memory_space<vmem>>, vector<1x128xf32>
    tpu.vector_store %arg2[%c1_27, %c0_28], %101 {strides = array<i32>} : memref<8x128xf32, #tpu.memory_space<vmem>>, vector<1x128xf32>,
    return
  }
  func.func @transform_0(%arg0: i32) -> (i32, i32) {
    %c0_i32 = arith.constant 0 : i32
    %c0_i32_0 = arith.constant 0 : i32
    return %c0_i32, %arg0 : i32, i32
  }
  func.func @transform_1(%arg0: i32) -> (i32, i32) {
    %c0_i32 = arith.constant 0 : i32
    %c0_i32_0 = arith.constant 0 : i32
    return %c0_i32, %arg0 : i32, i32
  }
}

</mosaic_0001>

<llo_original>
// kernel: tpu_custom_call.1
$region0: #{tpu_custom_call.1}
  #allocation0 [shape = 'u32[]', space=smem, size = 0x4, offset = 0x4, fixed_abs, tag = 'smem constant byte address 0x4 - core index']
  #allocation1 [shape = 'u32[144,128]{1,0:T(1,128)}', space=vmem, size = 0x12000, scoped, tag = 'internal scratch']
  %s0 = inlined_call_operand.hbm [shape: f32[8,128], index: 0, kind: input, shape index: {}]
  %s1 = inlined_call_operand.hbm [shape: f32[8,128], index: 1, kind: output, shape index: {}]
  %s2 = sld [smem:[#allocation0]]
  $region18: #{tpu_custom_call.1} parent=0
    _
  %s4 = ssub.s32 1, %s2
  %s5 = scalar_select 0, %s4, %s2
  $region1: #{tpu_custom_call.1} parent=0
    #allocation2 [shape = 'u8[4096]{0}', space=vmem, size = 0x1000, scoped, tag = 'input window, operand 0, single buffered']
    #allocation3 [shape = 's32[1]{0}', space=sflag, size = 0x4, scoped, tag = 'scoped memory for tpu_custom_call.1']
    #allocation4 [shape = 's32[1]{0}', space=sflag, size = 0x4, scoped, tag = 'scoped memory for tpu_custom_call.1']
    #allocation5 [shape = 'u8[4096]{0}', space=vmem, size = 0x1000, scoped, tag = 'output window, operand 0, single buffered']
    %6 = vsyncpa [#allocation3], 0
    %7 = vsyncpa [#allocation4], 0
    // Predicated region
    $region2: #{tpu_custom_call.1} parent=1 // pred_check
      _
    $region3: #{tpu_custom_call.1} parent=1 // pred_check_branch
      %9 = sbr.rel (0) target = $region5
    $region4: #{tpu_custom_call.1} parent=1 // pred_region
      %s11 = ssub.s32 128, 128
      %12 = vsyncadd [#allocation3], %s11
      %s14 = sshll.u32 [#allocation2], 4
      %s15 = int_to_ptr.vmem [resolvable:$true] %s14
      %17 = dma.hbm_to_vmem [thread:$0]  %s0, 128, %s15, [#allocation3]
    $region5: #{tpu_custom_call.1} parent=1 // pred_fallthru
      _
    // Predicated region
    $region6: #{tpu_custom_call.1} parent=1 // pred_check
      _
    $region7: #{tpu_custom_call.1} parent=1 // pred_check_branch
      %19 = sbr.rel (0) target = $region9
    $region8: #{tpu_custom_call.1} parent=1 // pred_region
      %20 = dma.done [#allocation3], 128
    $region9: #{tpu_custom_call.1} parent=1 // pred_fallthru
      _
    %v21 = vld [vmem:[#allocation2] sm:$0x1]
    %22 = vst [vmem:[#allocation5] sm:$0x1] %v21
    %v23 = vld [vmem:[#allocation2 + $0x1] sm:$0x1]
    %v24 = vld [vmem:[#allocation2 + $0x2] sm:$0x1]
    %v25 = vld [vmem:[#allocation2 + $0x3] sm:$0x1]
    %v26 = vld [vmem:[#allocation2 + $0x4] sm:$0x1]
    %v27 = vld [vmem:[#allocation2 + $0x5] sm:$0x1]
    %v28 = vld [vmem:[#allocation2 + $0x6] sm:$0x1]
    %v29 = vld [vmem:[#allocation2 + $0x7] sm:$0x1]
    %30 = vst [vmem:[#allocation5 + $0x7] sm:$0x1] %v29
    %v31 = vmul.f32 %v29, %v29
    %v32 = vsub.f32 1.0, %v31
    %v33 = vrcp.pop %v32
    %v34 = vmul.f32 %v29, %v28
    %v35 = vsub.f32 %v23, %v34
    %v36 = vmul.f32 %v35, %v33
    %v37 = vmul.f32 %v29, %v27
    %v38 = vsub.f32 %v24, %v37
    %v39 = vmul.f32 %v38, %v33
    %v40 = vmul.f32 %v29, %v26
    %v41 = vsub.f32 %v25, %v40
    %v42 = vmul.f32 %v41, %v33
    %v43 = vmul.f32 %v29, %v25
    %v44 = vsub.f32 %v26, %v43
    %v45 = vmul.f32 %v44, %v33
    %v46 = vmul.f32 %v29, %v24
    %v47 = vsub.f32 %v27, %v46
    %v48 = vmul.f32 %v47, %v33
    %v49 = vmul.f32 %v29, %v23
    %v50 = vsub.f32 %v28, %v49
    %v51 = vmul.f32 %v50, %v33
    %52 = vst [vmem:[#allocation5 + $0x6] sm:$0x1] %v51
    %v53 = vmul.f32 %v51, %v51
    %v54 = vsub.f32 1.0, %v53
    %v55 = vrcp.pop %v54
    %v56 = vmul.f32 %v51, %v48
    %v57 = vsub.f32 %v36, %v56
    %v58 = vmul.f32 %v57, %v55
    %v59 = vmul.f32 %v51, %v45
    %v60 = vsub.f32 %v39, %v59
    %v61 = vmul.f32 %v60, %v55
    %v62 = vmul.f32 %v51, %v42
    %v63 = vsub.f32 %v42, %v62
    %v64 = vmul.f32 %v63, %v55
    %v65 = vmul.f32 %v51, %v39
    %v66 = vsub.f32 %v45, %v65
    %v67 = vmul.f32 %v66, %v55
    %v68 = vmul.f32 %v51, %v36
    %v69 = vsub.f32 %v48, %v68
    %v70 = vmul.f32 %v69, %v55
    %71 = vst [vmem:[#allocation5 + $0x5] sm:$0x1] %v70
    %v72 = vmul.f32 %v70, %v70
    %v73 = vsub.f32 1.0, %v72
    %v74 = vrcp.pop %v73
    %v75 = vmul.f32 %v70, %v67
    %v76 = vsub.f32 %v58, %v75
    %v77 = vmul.f32 %v76, %v74
    %v78 = vmul.f32 %v70, %v64
    %v79 = vsub.f32 %v61, %v78
    %v80 = vmul.f32 %v79, %v74
    %v81 = vmul.f32 %v70, %v61
    %v82 = vsub.f32 %v64, %v81
    %v83 = vmul.f32 %v82, %v74
    %v84 = vmul.f32 %v70, %v58
    %v85 = vsub.f32 %v67, %v84
    %v86 = vmul.f32 %v85, %v74
    %87 = vst [vmem:[#allocation5 + $0x4] sm:$0x1] %v86
    %v88 = vmul.f32 %v86, %v86
    %v89 = vsub.f32 1.0, %v88
    %v90 = vrcp.pop %v89
    %v91 = vmul.f32 %v86, %v83
    %v92 = vsub.f32 %v77, %v91
    %v93 = vmul.f32 %v92, %v90
    %v94 = vmul.f32 %v86, %v80
    %v95 = vsub.f32 %v80, %v94
    %v96 = vmul.f32 %v95, %v90
    %v97 = vmul.f32 %v86, %v77
    %v98 = vsub.f32 %v83, %v97
    %v99 = vmul.f32 %v98, %v90
    %100 = vst [vmem:[#allocation5 + $0x3] sm:$0x1] %v99
    %v101 = vmul.f32 %v99, %v99
    %v102 = vsub.f32 1.0, %v101
    %v103 = vrcp.pop %v102
    %v104 = vmul.f32 %v99, %v96
    %v105 = vsub.f32 %v93, %v104
    %v106 = vmul.f32 %v105, %v103
    %v107 = vmul.f32 %v99, %v93
    %v108 = vsub.f32 %v96, %v107
    %v109 = vmul.f32 %v108, %v103
    %110 = vst [vmem:[#allocation5 + $0x2] sm:$0x1] %v109
    %v111 = vmul.f32 %v109, %v109
    %v112 = vsub.f32 1.0, %v111
    %v113 = vrcp.pop %v112
    %v114 = vmul.f32 %v109, %v106
    %v115 = vsub.f32 %v106, %v114
    %v116 = vmul.f32 %v115, %v113
    %117 = vst [vmem:[#allocation5 + $0x1] sm:$0x1] %v116
    // Predicated region
    $region10: #{tpu_custom_call.1} parent=1 // pred_check
      _
    $region11: #{tpu_custom_call.1} parent=1 // pred_check_branch
      %119 = sbr.rel (0) target = $region13
    $region12: #{tpu_custom_call.1} parent=1 // pred_region
      %s121 = ssub.s32 128, 128
      %122 = vsyncadd [#allocation4], %s121
      %s124 = sshll.u32 [#allocation5], 4
      %s125 = int_to_ptr.vmem [resolvable:$true] %s124
      %127 = dma.vmem_to_hbm [thread:$0]  %s125, 128, %s1, [#allocation4]
    $region13: #{tpu_custom_call.1} parent=1 // pred_fallthru
      _
    // Predicated region
    $region14: #{tpu_custom_call.1} parent=1 // pred_check
      _
    $region15: #{tpu_custom_call.1} parent=1 // pred_check_branch
      %129 = sbr.rel (0) target = $region17
    $region16: #{tpu_custom_call.1} parent=1 // pred_region
      %130 = dma.done [#allocation4], 128
    $region17: #{tpu_custom_call.1} parent=1 // pred_fallthru
      _
    %131 = vsyncpa [#allocation3], 1
    %132 = vsyncpa [#allocation4], 1

</llo_original>
